<compile_context>
chip_gen: v6e
topology: v6e:2x2x1
jax: 0.10.0
libtpu: 0.0.40
codegen_flags: <defaults>
</compile_context>

<pallas_src>
import functools

import numpy as np
import jax
import jax.numpy as jnp
from jax.experimental import pallas as pl
from jax.experimental.pallas import tpu as pltpu

USER_NUM = 64
ITEM_NUM = 80
FACTOR = 32           # factor_num -> 4*F = 128 = one lane-dense vreg row
BATCH = 8             # 3*B = 24 rows -> sublane-aligned output


# --------------------------------------------------------------------------- kernel
def _fused_bpr_kernel(idx_ref, a_ref, x0_ref,      # VMEM inputs
                      gcat_ref,                    # VMEM output (3B, 4F)
                      xs_ref,                      # VMEM scratch (P, F)
                      *, m_rows):
    """3-layer GCN + one-hot MXU gather + relu(concat), fully fused, grid=()."""
    a = a_ref[...]                      # (M, P)   block adjacency, d on the diagonal
    x0 = x0_ref[...]                    # (P, F)   [users ; items ; zero padding]
    P, F = x0_ref.shape

    # One-hot gather matrix over the real rows only: (3B, M).  Entries are exactly
    # 0/1, so the matmul-gather below is bit-exact; rides the otherwise-idle MXU.
    idx = idx_ref[...]                  # (3B, 1) int32, already offset + clamped
    iota = jax.lax.broadcasted_iota(jnp.int32, (idx.shape[0], m_rows), 1)
    onehot = (iota == idx).astype(jnp.float32)

    # Layer scratch: rows m_rows..P stay zero so every layer contracts K = P (lane
    # aligned) without pushing padded output rows through the MXU.
    if m_rows < P:
        xs_ref[m_rows:, :] = jnp.zeros((P - m_rows, F), jnp.float32)

    # Raw-embedding gather (relu applied later; gather commutes with relu).
    g0 = jnp.dot(onehot, x0[:m_rows, :], preferred_element_type=jnp.float32)

    # relu(A_ui @ items + users*d_i) and the item counterpart == relu(A_full @ X).
    x1 = jnp.maximum(jnp.dot(a, x0, preferred_element_type=jnp.float32), 0.0)       # (M, F)
    g1 = jnp.dot(onehot, x1, preferred_element_type=jnp.float32)
    xs_ref[:m_rows, :] = x1

    x2 = jnp.maximum(jnp.dot(a, xs_ref[...], preferred_element_type=jnp.float32), 0.0)
    g2 = jnp.dot(onehot, x2, preferred_element_type=jnp.float32)
    xs_ref[:m_rows, :] = x2

    x3 = jnp.maximum(jnp.dot(a, xs_ref[...], preferred_element_type=jnp.float32), 0.0)
    g3 = jnp.dot(onehot, x3, preferred_element_type=jnp.float32)

    # relu(concat(...)): x1..x3 are already >= 0, so only the raw embeddings need
    # the outer relu.  Single lane-dense (3B, 4F) = (24, 128) store.
    gcat_ref[...] = jnp.concatenate([jnp.maximum(g0, 0.0), g1, g2, g3], axis=-1)


# --------------------------------------------------------------------------- packing
def pack_params(a_ui, a_iu, emb_u, emb_i, d_i, d_j):
    """One-time param prep: block packing + alignment padding.

    a_ui: (U, I), a_iu: (I, U), emb_u: (U, F), emb_i: (I, F), d_i: (U, 1), d_j: (I, 1).
    Returns A_full (M, P) and X0 (P, F) with M = 8-multiple >= U+I (trimmed MXU M dim)
    and P = 128-multiple >= U+I (lane-aligned contraction dim).
    """
    U, F = emb_u.shape
    I = emb_i.shape[0]
    n = U + I
    M = ((n + 7) // 8) * 8
    P = ((n + 127) // 128) * 128

    a_full = jnp.zeros((M, P), jnp.float32)
    a_full = a_full.at[:U, U:n].set(a_ui)
    a_full = a_full.at[U:n, :U].set(a_iu)
    # Fold the "x * d" self-loop terms into the diagonal -> 1 matmul per GCN layer.
    a_full = a_full.at[:U, :U].set(jnp.diag(d_i[:, 0]))
    a_full = a_full.at[U:n, U:n].set(jnp.diag(d_j[:, 0]))

    x0 = jnp.zeros((P, F), jnp.float32)
    x0 = x0.at[:U].set(emb_u)
    x0 = x0.at[U:n].set(emb_i)
    return a_full, x0


# --------------------------------------------------------------------------- wrapper
@functools.partial(jax.jit, static_argnames=("user_num", "item_num"))
def bpr_forward(user, item_i, item_j, a_full, x0, *, user_num, item_num):
    P, F = x0.shape
    M = a_full.shape[0]
    B = user.shape[0]

    # Clamp (TPU has no runtime bounds check on in-kernel reads), fold in the item
    # row offset, and stack into one (3B, 1) int32 gather-index array for the kernel.
    u = jnp.clip(user.astype(jnp.int32), 0, user_num - 1)
    ii = jnp.clip(item_i.astype(jnp.int32), 0, item_num - 1) + user_num
    jj = jnp.clip(item_j.astype(jnp.int32), 0, item_num - 1) + user_num
    idx = jnp.concatenate([u, ii, jj]).reshape(3 * B, 1)

    vmem = pl.BlockSpec(memory_space=pltpu.MemorySpace.VMEM)
    kernel = functools.partial(_fused_bpr_kernel, m_rows=M)
    gcat = pl.pallas_call(
        kernel,
        out_shape=jax.ShapeDtypeStruct((3 * B, 4 * F), jnp.float32),
        in_specs=[vmem, vmem, vmem],
        out_specs=vmem,
        scratch_shapes=[pltpu.VMEM((P, F), jnp.float32)],
    )(idx, a_full, x0)

    ue = gcat[:B]
    ie = gcat[B:2 * B]
    je = gcat[2 * B:]
    # BPR dot products done outside the kernel (keeps all kernel stores lane-dense).
    pred_i = jnp.sum(ue * ie, axis=-1)
    pred_j = jnp.sum(ue * je, axis=-1)
    return pred_i, pred_j, ue, ie, je


# --------------------------------------------------------------------------- reference
def bpr_reference(user, item_i, item_j, params):
    a_ui, a_iu, u0, i0, di, dj = params        # di: (U,1), dj: (I,1)
    relu = lambda x: jnp.maximum(x, 0.0)
    u1 = relu(a_ui @ i0 + u0 * di)
    i1 = relu(a_iu @ u0 + i0 * dj)
    u2 = relu(a_ui @ i1 + u1 * di)
    i2 = relu(a_iu @ u1 + i1 * dj)
    u3 = relu(a_ui @ i2 + u2 * di)
    i3 = relu(a_iu @ u2 + i2 * dj)
    gu = relu(jnp.concatenate([u0, u1, u2, u3], axis=-1))
    gi = relu(jnp.concatenate([i0, i1, i2, i3], axis=-1))
    ue = gu[user]
    ie = gi[item_i]
    je = gi[item_j]
    return (ue * ie).sum(-1), (ue * je).sum(-1), ue, ie, je


# --------------------------------------------------------------------------- main
if __name__ == "__main__":
    key = jax.random.PRNGKey(0)
    k_r, k_u, k_i, k_idx = jax.random.split(key, 4)

    # Deterministic synthetic interaction graph (stand-in for the torch sparse matrices).
    R = (jax.random.uniform(k_r, (USER_NUM, ITEM_NUM)) < 0.1).astype(jnp.float32)
    deg_u = R.sum(axis=1, keepdims=True)            # (U, 1)
    deg_i = R.sum(axis=0, keepdims=True).T          # (I, 1)
    a_ui = (R / jnp.sqrt((deg_u + 1.0) * (deg_i.T + 1.0))).astype(jnp.float32)   # (U, I)
    a_iu = a_ui.T                                                                # (I, U)
    d_i = (1.0 / (deg_u + 1.0)).astype(jnp.float32)   # (U, 1)
    d_j = (1.0 / (deg_i + 1.0)).astype(jnp.float32)   # (I, 1)

    # init_features_u / init_features_i (deterministic, in place of checkpoint features)
    emb_u = (0.1 * jax.random.normal(k_u, (USER_NUM, FACTOR))).astype(jnp.float32)
    emb_i = (0.1 * jax.random.normal(k_i, (ITEM_NUM, FACTOR))).astype(jnp.float32)

    user = jax.random.randint(k_idx, (BATCH,), 0, USER_NUM, dtype=jnp.int32)
    item_i = jax.random.randint(jax.random.fold_in(k_idx, 1), (BATCH,), 0, ITEM_NUM, dtype=jnp.int32)
    item_j = jax.random.randint(jax.random.fold_in(k_idx, 2), (BATCH,), 0, ITEM_NUM, dtype=jnp.int32)

    a_full, x0 = pack_params(a_ui, a_iu, emb_u, emb_i, d_i, d_j)

    outs = jax.block_until_ready(
        bpr_forward(user, item_i, item_j, a_full, x0,
                    user_num=USER_NUM, item_num=ITEM_NUM))
    refs = jax.block_until_ready(
        bpr_reference(user, item_i, item_j, (a_ui, a_iu, emb_u, emb_i, d_i, d_j)))

    for o, r in zip(outs, refs):
        np.testing.assert_allclose(np.asarray(o), np.asarray(r), rtol=1e-5, atol=1e-5)

    print("KERNEL_OK")
</pallas_src>

<mosaic_0001>
module attributes {stable_mosaic.version = 11 : i64} {
  func.func @_fused_bpr_kernel(%arg0: memref<24x1xi32, #tpu.memory_space<vmem>>, %arg1: memref<144x256xf32, #tpu.memory_space<vmem>>, %arg2: memref<256x32xf32, #tpu.memory_space<vmem>>, %arg3: memref<24x128xf32, #tpu.memory_space<vmem>>, %arg4: memref<256x32xf32, #tpu.memory_space<vmem>>) attributes {dimension_semantics = [], scalar_prefetch = 0 : i64, scratch_operands = 1 : i64, tpu.core_type = #tpu.core_type<tc>} {
    %c0 = arith.constant 0 : index
    %c0_0 = arith.constant 0 : index
    %0 = vector.load %arg1[%c0, %c0_0] : memref<144x256xf32, #tpu.memory_space<vmem>>, vector<144x256xf32>
    %c0_1 = arith.constant 0 : index
    %c0_2 = arith.constant 0 : index
    %1 = vector.load %arg2[%c0_1, %c0_2] : memref<256x32xf32, #tpu.memory_space<vmem>>, vector<256x32xf32>
    %c0_3 = arith.constant 0 : index
    %c0_4 = arith.constant 0 : index
    %2 = vector.load %arg0[%c0_3, %c0_4] : memref<24x1xi32, #tpu.memory_space<vmem>>, vector<24x1xi32>
    %3 = tpu.iota {dimensions = array<i32: 1>} : vector<24x144xi32>
    %4 = vector.broadcast %2 : vector<24x1xi32> to vector<24x144xi32>
    %5 = arith.cmpi eq, %3, %4 : vector<24x144xi32>
    %6 = arith.extui %5 : vector<24x144xi1> to vector<24x144xi32>
    %7 = arith.sitofp %6 : vector<24x144xi32> to vector<24x144xf32>
    %cst = arith.constant 0.000000e+00 : f32
    %8 = vector.broadcast %cst : f32 to vector<112x32xf32>
    %c144 = arith.constant 144 : index
    %c0_5 = arith.constant 0 : index
    %9 = vector.load %arg4[%c144, %c0_5] : memref<256x32xf32, #tpu.memory_space<vmem>>, vector<112x32xf32>
    tpu.vector_store %arg4[%c144, %c0_5], %8 {strides = array<i32>} : memref<256x32xf32, #tpu.memory_space<vmem>>, vector<112x32xf32>,
    %10 = vector.extract_strided_slice %1 {offsets = [0, 0], sizes = [144, 32], strides = [1, 1]} : vector<256x32xf32> to vector<144x32xf32>
    %cst_6 = arith.constant dense<0.000000e+00> : vector<24x32xf32>
    %11 = tpu.matmul %7, %10, %cst_6 {dimension_numbers = #tpu.dot_dimension_numbers<[1], [0], [0], [1], [0, 0, 1, 1], [], []>} : vector<24x144xf32>, vector<144x32xf32>, vector<24x32xf32> -> vector<24x32xf32>
    %cst_7 = arith.constant dense<0.000000e+00> : vector<144x32xf32>
    %12 = tpu.matmul %0, %1, %cst_7 {dimension_numbers = #tpu.dot_dimension_numbers<[1], [0], [0], [1], [0, 0, 1, 1], [], []>} : vector<144x256xf32>, vector<256x32xf32>, vector<144x32xf32> -> vector<144x32xf32>
    %cst_8 = arith.constant 0.000000e+00 : f32
    %13 = vector.broadcast %cst_8 : f32 to vector<144x32xf32>
    %14 = arith.maximumf %12, %13 : vector<144x32xf32>
    %cst_9 = arith.constant dense<0.000000e+00> : vector<24x32xf32>
    %15 = tpu.matmul %7, %14, %cst_9 {dimension_numbers = #tpu.dot_dimension_numbers<[1], [0], [0], [1], [0, 0, 1, 1], [], []>} : vector<24x144xf32>, vector<144x32xf32>, vector<24x32xf32> -> vector<24x32xf32>
    %c0_10 = arith.constant 0 : index
    %c0_11 = arith.constant 0 : index
    %16 = vector.load %arg4[%c0_10, %c0_11] : memref<256x32xf32, #tpu.memory_space<vmem>>, vector<144x32xf32>
    tpu.vector_store %arg4[%c0_10, %c0_11], %14 {strides = array<i32>} : memref<256x32xf32, #tpu.memory_space<vmem>>, vector<144x32xf32>,
    %c0_12 = arith.constant 0 : index
    %c0_13 = arith.constant 0 : index
    %17 = vector.load %arg4[%c0_12, %c0_13] : memref<256x32xf32, #tpu.memory_space<vmem>>, vector<256x32xf32>
    %cst_14 = arith.constant dense<0.000000e+00> : vector<144x32xf32>
    %18 = tpu.matmul %0, %17, %cst_14 {dimension_numbers = #tpu.dot_dimension_numbers<[1], [0], [0], [1], [0, 0, 1, 1], [], []>} : vector<144x256xf32>, vector<256x32xf32>, vector<144x32xf32> -> vector<144x32xf32>
    %cst_15 = arith.constant 0.000000e+00 : f32
    %19 = vector.broadcast %cst_15 : f32 to vector<144x32xf32>
    %20 = arith.maximumf %18, %19 : vector<144x32xf32>
    %cst_16 = arith.constant dense<0.000000e+00> : vector<24x32xf32>
    %21 = tpu.matmul %7, %20, %cst_16 {dimension_numbers = #tpu.dot_dimension_numbers<[1], [0], [0], [1], [0, 0, 1, 1], [], []>} : vector<24x144xf32>, vector<144x32xf32>, vector<24x32xf32> -> vector<24x32xf32>
    %c0_17 = arith.constant 0 : index
    %c0_18 = arith.constant 0 : index
    %22 = vector.load %arg4[%c0_17, %c0_18] : memref<256x32xf32, #tpu.memory_space<vmem>>, vector<144x32xf32>
    tpu.vector_store %arg4[%c0_17, %c0_18], %20 {strides = array<i32>} : memref<256x32xf32, #tpu.memory_space<vmem>>, vector<144x32xf32>,
    %c0_19 = arith.constant 0 : index
    %c0_20 = arith.constant 0 : index
    %23 = vector.load %arg4[%c0_19, %c0_20] : memref<256x32xf32, #tpu.memory_space<vmem>>, vector<256x32xf32>
    %cst_21 = arith.constant dense<0.000000e+00> : vector<144x32xf32>
    %24 = tpu.matmul %0, %23, %cst_21 {dimension_numbers = #tpu.dot_dimension_numbers<[1], [0], [0], [1], [0, 0, 1, 1], [], []>} : vector<144x256xf32>, vector<256x32xf32>, vector<144x32xf32> -> vector<144x32xf32>
    %cst_22 = arith.constant 0.000000e+00 : f32
    %25 = vector.broadcast %cst_22 : f32 to vector<144x32xf32>
    %26 = arith.maximumf %24, %25 : vector<144x32xf32>
    %cst_23 = arith.constant dense<0.000000e+00> : vector<24x32xf32>
    %27 = tpu.matmul %7, %26, %cst_23 {dimension_numbers = #tpu.dot_dimension_numbers<[1], [0], [0], [1], [0, 0, 1, 1], [], []>} : vector<24x144xf32>, vector<144x32xf32>, vector<24x32xf32> -> vector<24x32xf32>
    %cst_24 = arith.constant 0.000000e+00 : f32
    %28 = vector.broadcast %cst_24 : f32 to vector<24x32xf32>
    %29 = arith.maximumf %11, %28 : vector<24x32xf32>
    %30 = tpu.concatenate %29, %15, %21, %27 in 1 : vector<24x32xf32>, vector<24x32xf32>, vector<24x32xf32>, vector<24x32xf32> -> vector<24x128xf32>
    %c0_25 = arith.constant 0 : index
    %c0_26 = arith.constant 0 : index
    %31 = vector.load %arg3[%c0_25, %c0_26] : memref<24x128xf32, #tpu.memory_space<vmem>>, vector<24x128xf32>
    tpu.vector_store %arg3[%c0_25, %c0_26], %30 {strides = array<i32>} : memref<24x128xf32, #tpu.memory_space<vmem>>, vector<24x128xf32>,
    return
  }
}

</mosaic_0001>

<llo_original>
// kernel: bpr_forward.1
$region0: #{bpr_forward.1}
  #allocation0 [shape = 'u32[]', space=smem, size = 0x4, offset = 0x4, fixed_abs, tag = 'smem constant byte address 0x4 - core index']
  #allocation1 [shape = 'u32[144,128]{1,0:T(1,128)}', space=vmem, size = 0x12000, scoped, tag = 'internal scratch']
  #allocation2 [shape = 'f32[256,32]{1,0:T(8,128)}', space=vmem, size = 0x20000, scoped, tag = 'scratch operand']
  %s0 = inlined_call_operand.vmem [shape: s32[24,1], index: 0, kind: input, shape index: {}]
  %s1 = inlined_call_operand.vmem [shape: f32[144,256], index: 1, kind: input, shape index: {}]
  %s2 = inlined_call_operand.vmem [shape: f32[256,32], index: 2, kind: input, shape index: {}]
  %s3 = inlined_call_operand.vmem [shape: f32[24,128], index: 3, kind: output, shape index: {}]
  %s4 = sld [smem:[#allocation0]]
  $region22: #{bpr_forward.1} parent=0
    _
  %s6 = ssub.s32 1, %s4
  %s7 = scalar_select 0, %s6, %s4
  // Predicated region
  $region2: #{bpr_forward.1} parent=0 // pred_check
    _
  $region3: #{bpr_forward.1} parent=0 // pred_check_branch
    %9 = sbr.rel (0) target = $region5
  $region4: #{bpr_forward.1} parent=0 // pred_region
    _
  $region5: #{bpr_forward.1} parent=0 // pred_fallthru
    _
  // Predicated region
  $region6: #{bpr_forward.1} parent=0 // pred_check
    _
  $region7: #{bpr_forward.1} parent=0 // pred_check_branch
    %11 = sbr.rel (0) target = $region9
  $region8: #{bpr_forward.1} parent=0 // pred_region
    _
  $region9: #{bpr_forward.1} parent=0 // pred_fallthru
    _
  // Predicated region
  $region10: #{bpr_forward.1} parent=0 // pred_check
    _
  $region11: #{bpr_forward.1} parent=0 // pred_check_branch
    %13 = sbr.rel (0) target = $region13
  $region12: #{bpr_forward.1} parent=0 // pred_region
    _
  $region13: #{bpr_forward.1} parent=0 // pred_fallthru
    _
  %v14 = vld [vmem:[%s1] sm:$0xff]
  %v15 = vld [vmem:[%s1 + $0x8] sm:$0xff]
  %v16 = vld [vmem:[%s1 + $0x10] sm:$0xff]
  %v17 = vld [vmem:[%s1 + $0x18] sm:$0xff]
  %v18 = vld [vmem:[%s1 + $0x20] sm:$0xff]
  %v19 = vld [vmem:[%s1 + $0x28] sm:$0xff]
  %v20 = vld [vmem:[%s1 + $0x30] sm:$0xff]
  %v21 = vld [vmem:[%s1 + $0x38] sm:$0xff]
  %v22 = vld [vmem:[%s1 + $0x40] sm:$0xff]
  %v23 = vld [vmem:[%s1 + $0x48] sm:$0xff]
  %v24 = vld [vmem:[%s1 + $0x50] sm:$0xff]
  %v25 = vld [vmem:[%s1 + $0x58] sm:$0xff]
  %v26 = vld [vmem:[%s1 + $0x60] sm:$0xff]
  %v27 = vld [vmem:[%s1 + $0x68] sm:$0xff]
  %v28 = vld [vmem:[%s1 + $0x70] sm:$0xff]
  %v29 = vld [vmem:[%s1 + $0x78] sm:$0xff]
  %v30 = vld [vmem:[%s1 + $0x80] sm:$0xff]
  %v31 = vld [vmem:[%s1 + $0x88] sm:$0xff]
  %v32 = vld [vmem:[%s1 + $0x90] sm:$0xff]
  %v33 = vld [vmem:[%s1 + $0x98] sm:$0xff]
  %v34 = vld [vmem:[%s1 + $0xa0] sm:$0xff]
  %v35 = vld [vmem:[%s1 + $0xa8] sm:$0xff]
  %v36 = vld [vmem:[%s1 + $0xb0] sm:$0xff]
  %v37 = vld [vmem:[%s1 + $0xb8] sm:$0xff]
  %v38 = vld [vmem:[%s1 + $0xc0] sm:$0xff]
  %v39 = vld [vmem:[%s1 + $0xc8] sm:$0xff]
  %v40 = vld [vmem:[%s1 + $0xd0] sm:$0xff]
  %v41 = vld [vmem:[%s1 + $0xd8] sm:$0xff]
  %v42 = vld [vmem:[%s1 + $0xe0] sm:$0xff]
  %v43 = vld [vmem:[%s1 + $0xe8] sm:$0xff]
  %v44 = vld [vmem:[%s1 + $0xf0] sm:$0xff]
  %v45 = vld [vmem:[%s1 + $0xf8] sm:$0xff]
  %v46 = vld [vmem:[%s1 + $0x100] sm:$0xff]
  %v47 = vld [vmem:[%s1 + $0x108] sm:$0xff]
  %v48 = vld [vmem:[%s1 + $0x110] sm:$0xff]
  %v49 = vld [vmem:[%s1 + $0x118] sm:$0xff]
  %v50 = vld [vmem:[%s2] sm:$0xff]
  %v51 = vld [vmem:[%s2 + $0x8] sm:$0xff]
  %v52 = vld [vmem:[%s2 + $0x10] sm:$0xff]
  %v53 = vld [vmem:[%s2 + $0x18] sm:$0xff]
  %v54 = vld [vmem:[%s2 + $0x20] sm:$0xff]
  %v55 = vld [vmem:[%s2 + $0x28] sm:$0xff]
  %v56 = vld [vmem:[%s2 + $0x30] sm:$0xff]
  %v57 = vld [vmem:[%s2 + $0x38] sm:$0xff]
  %v58 = vld [vmem:[%s2 + $0x40] sm:$0xff]
  %v59 = vld [vmem:[%s2 + $0x48] sm:$0xff]
  %v60 = vld [vmem:[%s2 + $0x50] sm:$0xff]
  %v61 = vld [vmem:[%s2 + $0x58] sm:$0xff]
  %v62 = vld [vmem:[%s2 + $0x60] sm:$0xff]
  %v63 = vld [vmem:[%s2 + $0x68] sm:$0xff]
  %v64 = vld [vmem:[%s2 + $0x70] sm:$0xff]
  %v65 = vld [vmem:[%s2 + $0x78] sm:$0xff]
  %v66 = vld [vmem:[%s2 + $0x80] sm:$0xff]
  %v67 = vld [vmem:[%s2 + $0x88] sm:$0xff]
  %v68 = vld [vmem:[%s2 + $0x90] sm:$0xff]
  %v69 = vld [vmem:[%s2 + $0x98] sm:$0xff]
  %v70 = vld [vmem:[%s2 + $0xa0] sm:$0xff]
  %v71 = vld [vmem:[%s2 + $0xa8] sm:$0xff]
  %v72 = vld [vmem:[%s2 + $0xb0] sm:$0xff]
  %v73 = vld [vmem:[%s2 + $0xb8] sm:$0xff]
  %v74 = vld [vmem:[%s2 + $0xc0] sm:$0xff]
  %v75 = vld [vmem:[%s2 + $0xc8] sm:$0xff]
  %v76 = vld [vmem:[%s2 + $0xd0] sm:$0xff]
  %v77 = vld [vmem:[%s2 + $0xd8] sm:$0xff]
  %v78 = vld [vmem:[%s2 + $0xe0] sm:$0xff]
  %v79 = vld [vmem:[%s2 + $0xe8] sm:$0xff]
  %v80 = vld [vmem:[%s2 + $0xf0] sm:$0xff]
  %v81 = vld [vmem:[%s2 + $0xf8] sm:$0xff]
  %v82 = vld [vmem:[%s0] sm:$0xff]
  %v83 = vld [vmem:[%s0 + $0x8] sm:$0xff]
  %v84 = vld [vmem:[%s0 + $0x10] sm:$0xff]
  %v85 = vlaneseq
  %v86 = vand.u32 %v85, 127
  %v87 = vadd.s32 %v86, 128
  %88 = vset.pattern.permute.xlu0 0
  %89 = vperm.xlu0 %88, %v82
  %v90 = vpop.permute.xlu0 %89
  %91 = vset.pattern.permute.xlu0 0
  %92 = vperm.xlu0 %91, %v83
  %v93 = vpop.permute.xlu0 %92
  %94 = vset.pattern.permute.xlu0 0
  %95 = vperm.xlu0 %94, %v84
  %v96 = vpop.permute.xlu0 %95
  %vm97 = vcmp.eq.s32.totalorder %v86, %v90
  %vm98 = vcmp.eq.s32.totalorder %v87, %v90
  %vm99 = vcmp.eq.s32.totalorder %v86, %v93
  %vm100 = vcmp.eq.s32.totalorder %v87, %v93
  %vm101 = vcmp.eq.s32.totalorder %v86, %v96
  %vm102 = vcmp.eq.s32.totalorder %v87, %v96
  %v103 = vsel %vm97, 1, 0
  %v104 = vsel %vm98, 1, 0
  %v105 = vsel %vm99, 1, 0
  %v106 = vsel %vm100, 1, 0
  %v107 = vsel %vm101, 1, 0
  %v108 = vsel %vm102, 1, 0
  %v109 = vcvt.s32.f32 %v103
  %v110 = vcvt.s32.f32 %v104
  %v111 = vcvt.s32.f32 %v105
  %v112 = vcvt.s32.f32 %v106
  %v113 = vcvt.s32.f32 %v107
  %v114 = vcvt.s32.f32 %v108
  %vm115 = vcmask 261120
  %116 = vst.msk [vmem:[#allocation2 + $0x90] sm:$0xff] %vm115, 0.0
  %117 = vst.msk [vmem:[#allocation2 + $0x98] sm:$0xff] %vm115, 0.0
  %118 = vst.msk [vmem:[#allocation2 + $0xa0] sm:$0xff] %vm115, 0.0
  %119 = vst.msk [vmem:[#allocation2 + $0xa8] sm:$0xff] %vm115, 0.0
  %120 = vst.msk [vmem:[#allocation2 + $0xb0] sm:$0xff] %vm115, 0.0
  %121 = vst.msk [vmem:[#allocation2 + $0xb8] sm:$0xff] %vm115, 0.0
  %122 = vst.msk [vmem:[#allocation2 + $0xc0] sm:$0xff] %vm115, 0.0
  %123 = vst.msk [vmem:[#allocation2 + $0xc8] sm:$0xff] %vm115, 0.0
  %124 = vst.msk [vmem:[#allocation2 + $0xd0] sm:$0xff] %vm115, 0.0
  %125 = vst.msk [vmem:[#allocation2 + $0xd8] sm:$0xff] %vm115, 0.0
  %126 = vst.msk [vmem:[#allocation2 + $0xe0] sm:$0xff] %vm115, 0.0
  %127 = vst.msk [vmem:[#allocation2 + $0xe8] sm:$0xff] %vm115, 0.0
  %128 = vst.msk [vmem:[#allocation2 + $0xf0] sm:$0xff] %vm115, 0.0
  %129 = vst.msk [vmem:[#allocation2 + $0xf8] sm:$0xff] %vm115, 0.0
  %vm130 = vcmask 130048
  %v132 = vsel %vm130, %v110, 0
  %v135 = vsel %vm130, %v112, 0
  %v138 = vsel %vm130, %v114, 0
  %140 = vmatprep.subr.mxu0 0.0
  %141 = vmatpush1.msra.mxu0 %v65
  %142 = vmatprep.subr.mxu0 0.0
  %143 = vmatpush1.msra.mxu0 %v64
  %144 = vmatprep.subr.mxu0 0.0
  %145 = vmatpush1.msra.mxu0 %v63
  %146 = vmatprep.subr.mxu0 0.0
  %147 = vmatpush1.msra.mxu0 %v62
  %148 = vmatprep.subr.mxu0 0.0
  %149 = vmatpush1.msra.mxu0 %v61
  %150 = vmatprep.subr.mxu0 0.0
  %151 = vmatpush1.msra.mxu0 %v60
  %152 = vmatprep.subr.mxu0 0.0
  %153 = vmatpush1.msra.mxu0 %v59
  %154 = vmatprep.subr.mxu0 0.0
  %155 = vmatpush1.msra.mxu0 %v58
  %156 = vmatprep.subr.mxu0 0.0
  %157 = vmatpush1.msra.mxu0 %v57
  %158 = vmatprep.subr.mxu0 0.0
  %159 = vmatpush1.msra.mxu0 %v56
  %160 = vmatprep.subr.mxu0 0.0
  %161 = vmatpush1.msra.mxu0 %v55
  %162 = vmatprep.subr.mxu0 0.0
  %163 = vmatpush1.msra.mxu0 %v54
  %164 = vmatprep.subr.mxu0 0.0
  %165 = vmatpush1.msra.mxu0 %v53
  %166 = vmatprep.subr.mxu0 0.0
  %167 = vmatpush1.msra.mxu0 %v52
  %168 = vmatprep.subr.mxu0 0.0
  %169 = vmatpush1.msra.mxu0 %v51
  %170 = vmatprep.subr.mxu0 0.0
  %171 = vmatpush1.msra.mxu0 %v50
  %172 = vmatprep.subr.mxu0 0.0
  %173 = vmatpush2.msra.mxu0 0.0
  %174 = vmatprep.subr.mxu0 0.0
  %175 = vmatpush2.msra.mxu0 0.0
  %176 = vmatprep.subr.mxu0 0.0
  %177 = vmatpush2.msra.mxu0 0.0
  %178 = vmatprep.subr.mxu0 0.0
  %179 = vmatpush2.msra.mxu0 0.0
  %180 = vmatprep.subr.mxu0 0.0
  %181 = vmatpush2.msra.mxu0 0.0
  %182 = vmatprep.subr.mxu0 0.0
  %183 = vmatpush2.msra.mxu0 0.0
  %184 = vmatprep.subr.mxu0 0.0
  %185 = vmatpush2.msra.mxu0 0.0
  %186 = vmatprep.subr.mxu0 0.0
  %187 = vmatpush2.msra.mxu0 0.0
  %188 = vmatprep.subr.mxu0 0.0
  %189 = vmatpush2.msra.mxu0 0.0
  %190 = vmatprep.subr.mxu0 0.0
  %191 = vmatpush2.msra.mxu0 0.0
  %192 = vmatprep.subr.mxu0 0.0
  %193 = vmatpush2.msra.mxu0 0.0
  %194 = vmatprep.subr.mxu0 0.0
  %195 = vmatpush2.msra.mxu0 0.0
  %196 = vmatprep.subr.mxu0 0.0
  %197 = vmatpush2.msra.mxu0 0.0
  %198 = vmatprep.subr.mxu0 0.0
  %199 = vmatpush2.msra.mxu0 0.0
  %200 = vmatprep.subr.mxu0 0.0
  %201 = vmatpush2.msra.mxu0 %v67
  %202 = vmatprep.subr.mxu0 0.0
  %203 = vmatpush2.msra.mxu0 %v66
  %204 = vmatprep.mubr.f32.mxu0 %v132
  %205 = vmatmul.mubr.f32.gmra.mxu0 %v109
  %v206 = vpop.f32.mrf.mxu0
  %v207 = vadd.f32 0.0, %v206
  %v208 = vpop.f32.mrf.mxu0
  %209 = vmatprep.mubr.f32.mxu0 %v135
  %210 = vmatmul.mubr.f32.gmra.mxu0 %v111
  %v211 = vpop.f32.mrf.mxu0
  %v212 = vadd.f32 0.0, %v211
  %v213 = vpop.f32.mrf.mxu0
  %214 = vmatprep.mubr.f32.mxu0 %v138
  %215 = vmatmul.mubr.f32.gmra.mxu0 %v113
  %v216 = vpop.f32.mrf.mxu0
  %v217 = vadd.f32 0.0, %v216
  %v218 = vpop.f32.mrf.mxu0
  %219 = vdwg.mxu0
  %220 = vmatprep.subr.mxu0 0.0
  %221 = vmatpush1.msra.mxu0 %v65
  %222 = vmatprep.subr.mxu0 0.0
  %223 = vmatpush1.msra.mxu0 %v64
  %224 = vmatprep.subr.mxu0 0.0
  %225 = vmatpush1.msra.mxu0 %v63
  %226 = vmatprep.subr.mxu0 0.0
  %227 = vmatpush1.msra.mxu0 %v62
  %228 = vmatprep.subr.mxu0 0.0
  %229 = vmatpush1.msra.mxu0 %v61
  %230 = vmatprep.subr.mxu0 0.0
  %231 = vmatpush1.msra.mxu0 %v60
  %232 = vmatprep.subr.mxu0 0.0
  %233 = vmatpush1.msra.mxu0 %v59
  %234 = vmatprep.subr.mxu0 0.0
  %235 = vmatpush1.msra.mxu0 %v58
  %236 = vmatprep.subr.mxu0 0.0
  %237 = vmatpush1.msra.mxu0 %v57
  %238 = vmatprep.subr.mxu0 0.0
  %239 = vmatpush1.msra.mxu0 %v56
  %240 = vmatprep.subr.mxu0 0.0
  %241 = vmatpush1.msra.mxu0 %v55
  %242 = vmatprep.subr.mxu0 0.0
  %243 = vmatpush1.msra.mxu0 %v54
  %244 = vmatprep.subr.mxu0 0.0
  %245 = vmatpush1.msra.mxu0 %v53
  %246 = vmatprep.subr.mxu0 0.0
  %247 = vmatpush1.msra.mxu0 %v52
  %248 = vmatprep.subr.mxu0 0.0
  %249 = vmatpush1.msra.mxu0 %v51
  %250 = vmatprep.subr.mxu0 0.0
  %251 = vmatpush1.msra.mxu0 %v50
  %252 = vmatprep.subr.mxu0 0.0
  %253 = vmatpush2.msra.mxu0 %v81
  %254 = vmatprep.subr.mxu0 0.0
  %255 = vmatpush2.msra.mxu0 %v80
  %256 = vmatprep.subr.mxu0 0.0
  %257 = vmatpush2.msra.mxu0 %v79
  %258 = vmatprep.subr.mxu0 0.0
  %259 = vmatpush2.msra.mxu0 %v78
  %260 = vmatprep.subr.mxu0 0.0
  %261 = vmatpush2.msra.mxu0 %v77
  %262 = vmatprep.subr.mxu0 0.0
  %263 = vmatpush2.msra.mxu0 %v76
  %264 = vmatprep.subr.mxu0 0.0
  %265 = vmatpush2.msra.mxu0 %v75
  %266 = vmatprep.subr.mxu0 0.0
  %267 = vmatpush2.msra.mxu0 %v74
  %268 = vmatprep.subr.mxu0 0.0
  %269 = vmatpush2.msra.mxu0 %v73
  %270 = vmatprep.subr.mxu0 0.0
  %271 = vmatpush2.msra.mxu0 %v72
  %272 = vmatprep.subr.mxu0 0.0
  %273 = vmatpush2.msra.mxu0 %v71
  %274 = vmatprep.subr.mxu0 0.0
  %275 = vmatpush2.msra.mxu0 %v70
  %276 = vmatprep.subr.mxu0 0.0
  %277 = vmatpush2.msra.mxu0 %v69
  %278 = vmatprep.subr.mxu0 0.0
  %279 = vmatpush2.msra.mxu0 %v68
  %280 = vmatprep.subr.mxu0 0.0
  %281 = vmatpush2.msra.mxu0 %v67
  %282 = vmatprep.subr.mxu0 0.0
  %283 = vmatpush2.msra.mxu0 %v66
  %284 = vmatprep.mubr.f32.mxu0 %v15
  %285 = vmatmul.mubr.f32.gmra.mxu0 %v14
  %v286 = vpop.f32.mrf.mxu0
  %v287 = vadd.f32 0.0, %v286
  %v288 = vpop.f32.mrf.mxu0
  %289 = vmatprep.mubr.f32.mxu0 %v17
  %290 = vmatmul.mubr.f32.gmra.mxu0 %v16
  %v291 = vpop.f32.mrf.mxu0
  %v292 = vadd.f32 0.0, %v291
  %v293 = vpop.f32.mrf.mxu0
  %294 = vmatprep.mubr.f32.mxu0 %v19
  %295 = vmatmul.mubr.f32.gmra.mxu0 %v18
  %v296 = vpop.f32.mrf.mxu0
  %v297 = vadd.f32 0.0, %v296
  %v298 = vpop.f32.mrf.mxu0
  %299 = vmatprep.mubr.f32.mxu0 %v21
  %300 = vmatmul.mubr.f32.gmra.mxu0 %v20
  %v301 = vpop.f32.mrf.mxu0
  %v302 = vadd.f32 0.0, %v301
  %v303 = vpop.f32.mrf.mxu0
  %304 = vmatprep.mubr.f32.mxu0 %v23
  %305 = vmatmul.mubr.f32.gmra.mxu0 %v22
  %v306 = vpop.f32.mrf.mxu0
  %v307 = vadd.f32 0.0, %v306
  %v308 = vpop.f32.mrf.mxu0
  %309 = vmatprep.mubr.f32.mxu0 %v25
  %310 = vmatmul.mubr.f32.gmra.mxu0 %v24
  %v311 = vpop.f32.mrf.mxu0
  %v312 = vadd.f32 0.0, %v311
  %v313 = vpop.f32.mrf.mxu0
  %314 = vmatprep.mubr.f32.mxu0 %v27
  %315 = vmatmul.mubr.f32.gmra.mxu0 %v26
  %v316 = vpop.f32.mrf.mxu0
  %v317 = vadd.f32 0.0, %v316
  %v318 = vpop.f32.mrf.mxu0
  %319 = vmatprep.mubr.f32.mxu0 %v29
  %320 = vmatmul.mubr.f32.gmra.mxu0 %v28
  %v321 = vpop.f32.mrf.mxu0
  %v322 = vadd.f32 0.0, %v321
  %v323 = vpop.f32.mrf.mxu0
  %324 = vmatprep.mubr.f32.mxu0 %v31
  %325 = vmatmul.mubr.f32.gmra.mxu0 %v30
  %v326 = vpop.f32.mrf.mxu0
  %v327 = vadd.f32 0.0, %v326
  %v328 = vpop.f32.mrf.mxu0
  %329 = vmatprep.mubr.f32.mxu0 %v33
  %330 = vmatmul.mubr.f32.gmra.mxu0 %v32
  %v331 = vpop.f32.mrf.mxu0
  %v332 = vadd.f32 0.0, %v331
  %v333 = vpop.f32.mrf.mxu0
  %334 = vmatprep.mubr.f32.mxu0 %v35
  %335 = vmatmul.mubr.f32.gmra.mxu0 %v34
  %v336 = vpop.f32.mrf.mxu0
  %v337 = vadd.f32 0.0, %v336
  %v338 = vpop.f32.mrf.mxu0
  %339 = vmatprep.mubr.f32.mxu0 %v37
  %340 = vmatmul.mubr.f32.gmra.mxu0 %v36
  %v341 = vpop.f32.mrf.mxu0
  %v342 = vadd.f32 0.0, %v341
  %v343 = vpop.f32.mrf.mxu0
  %344 = vmatprep.mubr.f32.mxu0 %v39
  %345 = vmatmul.mubr.f32.gmra.mxu0 %v38
  %v346 = vpop.f32.mrf.mxu0
  %v347 = vadd.f32 0.0, %v346
  %v348 = vpop.f32.mrf.mxu0
  %349 = vmatprep.mubr.f32.mxu0 %v41
  %350 = vmatmul.mubr.f32.gmra.mxu0 %v40
  %v351 = vpop.f32.mrf.mxu0
  %v352 = vadd.f32 0.0, %v351
  %v353 = vpop.f32.mrf.mxu0
  %354 = vmatprep.mubr.f32.mxu0 %v43
  %355 = vmatmul.mubr.f32.gmra.mxu0 %v42
  %v356 = vpop.f32.mrf.mxu0
  %v357 = vadd.f32 0.0, %v356
  %v358 = vpop.f32.mrf.mxu0
  %359 = vmatprep.mubr.f32.mxu0 %v45
  %360 = vmatmul.mubr.f32.gmra.mxu0 %v44
  %v361 = vpop.f32.mrf.mxu0
  %v362 = vadd.f32 0.0, %v361
  %v363 = vpop.f32.mrf.mxu0
  %364 = vmatprep.mubr.f32.mxu0 %v47
  %365 = vmatmul.mubr.f32.gmra.mxu0 %v46
  %v366 = vpop.f32.mrf.mxu0
  %v367 = vadd.f32 0.0, %v366
  %v368 = vpop.f32.mrf.mxu0
  %369 = vmatprep.mubr.f32.mxu0 %v49
  %370 = vmatmul.mubr.f32.gmra.mxu0 %v48
  %v371 = vpop.f32.mrf.mxu0
  %v372 = vadd.f32 0.0, %v371
  %v373 = vpop.f32.mrf.mxu0
  %374 = vdwg.mxu0
  %v375 = vmax.f32 %v287, 0.0
  %v376 = vmax.f32 %v292, 0.0
  %v377 = vmax.f32 %v297, 0.0
  %v378 = vmax.f32 %v302, 0.0
  %v379 = vmax.f32 %v307, 0.0
  %v380 = vmax.f32 %v312, 0.0
  %v381 = vmax.f32 %v317, 0.0
  %v382 = vmax.f32 %v322, 0.0
  %v383 = vmax.f32 %v327, 0.0
  %v384 = vmax.f32 %v332, 0.0
  %v385 = vmax.f32 %v337, 0.0
  %v386 = vmax.f32 %v342, 0.0
  %v387 = vmax.f32 %v347, 0.0
  %v388 = vmax.f32 %v352, 0.0
  %v389 = vmax.f32 %v357, 0.0
  %v390 = vmax.f32 %v362, 0.0
  %v391 = vmax.f32 %v367, 0.0
  %v392 = vmax.f32 %v372, 0.0
  %393 = vmatprep.subr.mxu0 0.0
  %394 = vmatpush1.msra.mxu0 %v390
  %395 = vmatprep.subr.mxu0 0.0
  %396 = vmatpush1.msra.mxu0 %v389
  %397 = vmatprep.subr.mxu0 0.0
  %398 = vmatpush1.msra.mxu0 %v388
  %399 = vmatprep.subr.mxu0 0.0
  %400 = vmatpush1.msra.mxu0 %v387
  %401 = vmatprep.subr.mxu0 0.0
  %402 = vmatpush1.msra.mxu0 %v386
  %403 = vmatprep.subr.mxu0 0.0
  %404 = vmatpush1.msra.mxu0 %v385
  %405 = vmatprep.subr.mxu0 0.0
  %406 = vmatpush1.msra.mxu0 %v384
  %407 = vmatprep.subr.mxu0 0.0
  %408 = vmatpush1.msra.mxu0 %v383
  %409 = vmatprep.subr.mxu0 0.0
  %410 = vmatpush1.msra.mxu0 %v382
  %411 = vmatprep.subr.mxu0 0.0
  %412 = vmatpush1.msra.mxu0 %v381
  %413 = vmatprep.subr.mxu0 0.0
  %414 = vmatpush1.msra.mxu0 %v380
  %415 = vmatprep.subr.mxu0 0.0
  %416 = vmatpush1.msra.mxu0 %v379
  %417 = vmatprep.subr.mxu0 0.0
  %418 = vmatpush1.msra.mxu0 %v378
  %419 = vmatprep.subr.mxu0 0.0
  %420 = vmatpush1.msra.mxu0 %v377
  %421 = vmatprep.subr.mxu0 0.0
  %422 = vmatpush1.msra.mxu0 %v376
  %423 = vmatprep.subr.mxu0 0.0
  %424 = vmatpush1.msra.mxu0 %v375
  %425 = vmatprep.subr.mxu0 0.0
  %426 = vmatpush2.msra.mxu0 0.0
  %427 = vmatprep.subr.mxu0 0.0
  %428 = vmatpush2.msra.mxu0 0.0
  %429 = vmatprep.subr.mxu0 0.0
  %430 = vmatpush2.msra.mxu0 0.0
  %431 = vmatprep.subr.mxu0 0.0
  %432 = vmatpush2.msra.mxu0 0.0
  %433 = vmatprep.subr.mxu0 0.0
  %434 = vmatpush2.msra.mxu0 0.0
  %435 = vmatprep.subr.mxu0 0.0
  %436 = vmatpush2.msra.mxu0 0.0
  %437 = vmatprep.subr.mxu0 0.0
  %438 = vmatpush2.msra.mxu0 0.0
  %439 = vmatprep.subr.mxu0 0.0
  %440 = vmatpush2.msra.mxu0 0.0
  %441 = vmatprep.subr.mxu0 0.0
  %442 = vmatpush2.msra.mxu0 0.0
  %443 = vmatprep.subr.mxu0 0.0
  %444 = vmatpush2.msra.mxu0 0.0
  %445 = vmatprep.subr.mxu0 0.0
  %446 = vmatpush2.msra.mxu0 0.0
  %447 = vmatprep.subr.mxu0 0.0
  %448 = vmatpush2.msra.mxu0 0.0
  %449 = vmatprep.subr.mxu0 0.0
  %450 = vmatpush2.msra.mxu0 0.0
  %451 = vmatprep.subr.mxu0 0.0
  %452 = vmatpush2.msra.mxu0 0.0
  %453 = vmatprep.subr.mxu0 0.0
  %454 = vmatpush2.msra.mxu0 %v392
  %455 = vmatprep.subr.mxu0 0.0
  %456 = vmatpush2.msra.mxu0 %v391
  %457 = vmatprep.mubr.f32.mxu0 %v132
  %458 = vmatmul.mubr.f32.gmra.mxu0 %v109
  %v459 = vpop.f32.mrf.mxu0
  %v460 = vadd.f32 0.0, %v459
  %v461 = vpop.f32.mrf.mxu0
  %462 = vmatprep.mubr.f32.mxu0 %v135
  %463 = vmatmul.mubr.f32.gmra.mxu0 %v111
  %v464 = vpop.f32.mrf.mxu0
  %v465 = vadd.f32 0.0, %v464
  %v466 = vpop.f32.mrf.mxu0
  %467 = vmatprep.mubr.f32.mxu0 %v138
  %468 = vmatmul.mubr.f32.gmra.mxu0 %v113
  %v469 = vpop.f32.mrf.mxu0
  %v470 = vadd.f32 0.0, %v469
  %v471 = vpop.f32.mrf.mxu0
  %472 = vdwg.mxu0
  %473 = vst.msk [vmem:[#allocation2] sm:$0xff] %vm115, %v375
  %474 = vst.msk [vmem:[#allocation2 + $0x8] sm:$0xff] %vm115, %v376
  %475 = vst.msk [vmem:[#allocation2 + $0x10] sm:$0xff] %vm115, %v377
  %476 = vst.msk [vmem:[#allocation2 + $0x18] sm:$0xff] %vm115, %v378
  %477 = vst.msk [vmem:[#allocation2 + $0x20] sm:$0xff] %vm115, %v379
  %478 = vst.msk [vmem:[#allocation2 + $0x28] sm:$0xff] %vm115, %v380
  %479 = vst.msk [vmem:[#allocation2 + $0x30] sm:$0xff] %vm115, %v381
  %480 = vst.msk [vmem:[#allocation2 + $0x38] sm:$0xff] %vm115, %v382
  %481 = vst.msk [vmem:[#allocation2 + $0x40] sm:$0xff] %vm115, %v383
  %482 = vst.msk [vmem:[#allocation2 + $0x48] sm:$0xff] %vm115, %v384
  %483 = vst.msk [vmem:[#allocation2 + $0x50] sm:$0xff] %vm115, %v385
  %484 = vst.msk [vmem:[#allocation2 + $0x58] sm:$0xff] %vm115, %v386
  %485 = vst.msk [vmem:[#allocation2 + $0x60] sm:$0xff] %vm115, %v387
  %486 = vst.msk [vmem:[#allocation2 + $0x68] sm:$0xff] %vm115, %v388
  %487 = vst.msk [vmem:[#allocation2 + $0x70] sm:$0xff] %vm115, %v389
  %488 = vst.msk [vmem:[#allocation2 + $0x78] sm:$0xff] %vm115, %v390
  %489 = vst.msk [vmem:[#allocation2 + $0x80] sm:$0xff] %vm115, %v391
  %490 = vst.msk [vmem:[#allocation2 + $0x88] sm:$0xff] %vm115, %v392
  %v491 = vld [vmem:[#allocation2] sm:$0xff]
  %v492 = vld [vmem:[#allocation2 + $0x8] sm:$0xff]
  %v493 = vld [vmem:[#allocation2 + $0x10] sm:$0xff]
  %v494 = vld [vmem:[#allocation2 + $0x18] sm:$0xff]
  %v495 = vld [vmem:[#allocation2 + $0x20] sm:$0xff]
  %v496 = vld [vmem:[#allocation2 + $0x28] sm:$0xff]
  %v497 = vld [vmem:[#allocation2 + $0x30] sm:$0xff]
  %v498 = vld [vmem:[#allocation2 + $0x38] sm:$0xff]
  %v499 = vld [vmem:[#allocation2 + $0x40] sm:$0xff]
  %v500 = vld [vmem:[#allocation2 + $0x48] sm:$0xff]
  %v501 = vld [vmem:[#allocation2 + $0x50] sm:$0xff]
  %v502 = vld [vmem:[#allocation2 + $0x58] sm:$0xff]
  %v503 = vld [vmem:[#allocation2 + $0x60] sm:$0xff]
  %v504 = vld [vmem:[#allocation2 + $0x68] sm:$0xff]
  %v505 = vld [vmem:[#allocation2 + $0x70] sm:$0xff]
  %v506 = vld [vmem:[#allocation2 + $0x78] sm:$0xff]
  %v507 = vld [vmem:[#allocation2 + $0x80] sm:$0xff]
  %v508 = vld [vmem:[#allocation2 + $0x88] sm:$0xff]
  %v509 = vld [vmem:[#allocation2 + $0x90] sm:$0xff]
  %v510 = vld [vmem:[#allocation2 + $0x98] sm:$0xff]
  %v511 = vld [vmem:[#allocation2 + $0xa0] sm:$0xff]
  %v512 = vld [vmem:[#allocation2 + $0xa8] sm:$0xff]
  %v513 = vld [vmem:[#allocation2 + $0xb0] sm:$0xff]
  %v514 = vld [vmem:[#allocation2 + $0xb8] sm:$0xff]
  %v515 = vld [vmem:[#allocation2 + $0xc0] sm:$0xff]
  %v516 = vld [vmem:[#allocation2 + $0xc8] sm:$0xff]
  %v517 = vld [vmem:[#allocation2 + $0xd0] sm:$0xff]
  %v518 = vld [vmem:[#allocation2 + $0xd8] sm:$0xff]
  %v519 = vld [vmem:[#allocation2 + $0xe0] sm:$0xff]
  %v520 = vld [vmem:[#allocation2 + $0xe8] sm:$0xff]
  %v521 = vld [vmem:[#allocation2 + $0xf0] sm:$0xff]
  %v522 = vld [vmem:[#allocation2 + $0xf8] sm:$0xff]
  %523 = vmatprep.subr.mxu0 0.0
  %524 = vmatpush1.msra.mxu0 %v506
  %525 = vmatprep.subr.mxu0 0.0
  %526 = vmatpush1.msra.mxu0 %v505
  %527 = vmatprep.subr.mxu0 0.0
  %528 = vmatpush1.msra.mxu0 %v504
  %529 = vmatprep.subr.mxu0 0.0
  %530 = vmatpush1.msra.mxu0 %v503
  %531 = vmatprep.subr.mxu0 0.0
  %532 = vmatpush1.msra.mxu0 %v502
  %533 = vmatprep.subr.mxu0 0.0
  %534 = vmatpush1.msra.mxu0 %v501
  %535 = vmatprep.subr.mxu0 0.0
  %536 = vmatpush1.msra.mxu0 %v500
  %537 = vmatprep.subr.mxu0 0.0
  %538 = vmatpush1.msra.mxu0 %v499
  %539 = vmatprep.subr.mxu0 0.0
  %540 = vmatpush1.msra.mxu0 %v498
  %541 = vmatprep.subr.mxu0 0.0
  %542 = vmatpush1.msra.mxu0 %v497
  %543 = vmatprep.subr.mxu0 0.0
  %544 = vmatpush1.msra.mxu0 %v496
  %545 = vmatprep.subr.mxu0 0.0
  %546 = vmatpush1.msra.mxu0 %v495
  %547 = vmatprep.subr.mxu0 0.0
  %548 = vmatpush1.msra.mxu0 %v494
  %549 = vmatprep.subr.mxu0 0.0
  %550 = vmatpush1.msra.mxu0 %v493
  %551 = vmatprep.subr.mxu0 0.0
  %552 = vmatpush1.msra.mxu0 %v492
  %553 = vmatprep.subr.mxu0 0.0
  %554 = vmatpush1.msra.mxu0 %v491
  %555 = vmatprep.subr.mxu0 0.0
  %556 = vmatpush2.msra.mxu0 %v522
  %557 = vmatprep.subr.mxu0 0.0
  %558 = vmatpush2.msra.mxu0 %v521
  %559 = vmatprep.subr.mxu0 0.0
  %560 = vmatpush2.msra.mxu0 %v520
  %561 = vmatprep.subr.mxu0 0.0
  %562 = vmatpush2.msra.mxu0 %v519
  %563 = vmatprep.subr.mxu0 0.0
  %564 = vmatpush2.msra.mxu0 %v518
  %565 = vmatprep.subr.mxu0 0.0
  %566 = vmatpush2.msra.mxu0 %v517
  %567 = vmatprep.subr.mxu0 0.0
  %568 = vmatpush2.msra.mxu0 %v516
  %569 = vmatprep.subr.mxu0 0.0
  %570 = vmatpush2.msra.mxu0 %v515
  %571 = vmatprep.subr.mxu0 0.0
  %572 = vmatpush2.msra.mxu0 %v514
  %573 = vmatprep.subr.mxu0 0.0
  %574 = vmatpush2.msra.mxu0 %v513
  %575 = vmatprep.subr.mxu0 0.0
  %576 = vmatpush2.msra.mxu0 %v512
  %577 = vmatprep.subr.mxu0 0.0
  %578 = vmatpush2.msra.mxu0 %v511
  %579 = vmatprep.subr.mxu0 0.0
  %580 = vmatpush2.msra.mxu0 %v510
  %581 = vmatprep.subr.mxu0 0.0
  %582 = vmatpush2.msra.mxu0 %v509
  %583 = vmatprep.subr.mxu0 0.0
  %584 = vmatpush2.msra.mxu0 %v508
  %585 = vmatprep.subr.mxu0 0.0
  %586 = vmatpush2.msra.mxu0 %v507
  %587 = vmatprep.mubr.f32.mxu0 %v15
  %588 = vmatmul.mubr.f32.gmra.mxu0 %v14
  %v589 = vpop.f32.mrf.mxu0
  %v590 = vadd.f32 0.0, %v589
  %v591 = vpop.f32.mrf.mxu0
  %592 = vmatprep.mubr.f32.mxu0 %v17
  %593 = vmatmul.mubr.f32.gmra.mxu0 %v16
  %v594 = vpop.f32.mrf.mxu0
  %v595 = vadd.f32 0.0, %v594
  %v596 = vpop.f32.mrf.mxu0
  %597 = vmatprep.mubr.f32.mxu0 %v19
  %598 = vmatmul.mubr.f32.gmra.mxu0 %v18
  %v599 = vpop.f32.mrf.mxu0
  %v600 = vadd.f32 0.0, %v599
  %v601 = vpop.f32.mrf.mxu0
  %602 = vmatprep.mubr.f32.mxu0 %v21
  %603 = vmatmul.mubr.f32.gmra.mxu0 %v20
  %v604 = vpop.f32.mrf.mxu0
  %v605 = vadd.f32 0.0, %v604
  %v606 = vpop.f32.mrf.mxu0
  %607 = vmatprep.mubr.f32.mxu0 %v23
  %608 = vmatmul.mubr.f32.gmra.mxu0 %v22
  %v609 = vpop.f32.mrf.mxu0
  %v610 = vadd.f32 0.0, %v609
  %v611 = vpop.f32.mrf.mxu0
  %612 = vmatprep.mubr.f32.mxu0 %v25
  %613 = vmatmul.mubr.f32.gmra.mxu0 %v24
  %v614 = vpop.f32.mrf.mxu0
  %v615 = vadd.f32 0.0, %v614
  %v616 = vpop.f32.mrf.mxu0
  %617 = vmatprep.mubr.f32.mxu0 %v27
  %618 = vmatmul.mubr.f32.gmra.mxu0 %v26
  %v619 = vpop.f32.mrf.mxu0
  %v620 = vadd.f32 0.0, %v619
  %v621 = vpop.f32.mrf.mxu0
  %622 = vmatprep.mubr.f32.mxu0 %v29
  %623 = vmatmul.mubr.f32.gmra.mxu0 %v28
  %v624 = vpop.f32.mrf.mxu0
  %v625 = vadd.f32 0.0, %v624
  %v626 = vpop.f32.mrf.mxu0
  %627 = vmatprep.mubr.f32.mxu0 %v31
  %628 = vmatmul.mubr.f32.gmra.mxu0 %v30
  %v629 = vpop.f32.mrf.mxu0
  %v630 = vadd.f32 0.0, %v629
  %v631 = vpop.f32.mrf.mxu0
  %632 = vmatprep.mubr.f32.mxu0 %v33
  %633 = vmatmul.mubr.f32.gmra.mxu0 %v32
  %v634 = vpop.f32.mrf.mxu0
  %v635 = vadd.f32 0.0, %v634
  %v636 = vpop.f32.mrf.mxu0
  %637 = vmatprep.mubr.f32.mxu0 %v35
  %638 = vmatmul.mubr.f32.gmra.mxu0 %v34
  %v639 = vpop.f32.mrf.mxu0
  %v640 = vadd.f32 0.0, %v639
  %v641 = vpop.f32.mrf.mxu0
  %642 = vmatprep.mubr.f32.mxu0 %v37
  %643 = vmatmul.mubr.f32.gmra.mxu0 %v36
  %v644 = vpop.f32.mrf.mxu0
  %v645 = vadd.f32 0.0, %v644
  %v646 = vpop.f32.mrf.mxu0
  %647 = vmatprep.mubr.f32.mxu0 %v39
  %648 = vmatmul.mubr.f32.gmra.mxu0 %v38
  %v649 = vpop.f32.mrf.mxu0
  %v650 = vadd.f32 0.0, %v649
  %v651 = vpop.f32.mrf.mxu0
  %652 = vmatprep.mubr.f32.mxu0 %v41
  %653 = vmatmul.mubr.f32.gmra.mxu0 %v40
  %v654 = vpop.f32.mrf.mxu0
  %v655 = vadd.f32 0.0, %v654
  %v656 = vpop.f32.mrf.mxu0
  %657 = vmatprep.mubr.f32.mxu0 %v43
  %658 = vmatmul.mubr.f32.gmra.mxu0 %v42
  %v659 = vpop.f32.mrf.mxu0
  %v660 = vadd.f32 0.0, %v659
  %v661 = vpop.f32.mrf.mxu0
  %662 = vmatprep.mubr.f32.mxu0 %v45
  %663 = vmatmul.mubr.f32.gmra.mxu0 %v44
  %v664 = vpop.f32.mrf.mxu0
  %v665 = vadd.f32 0.0, %v664
  %v666 = vpop.f32.mrf.mxu0
  %667 = vmatprep.mubr.f32.mxu0 %v47
  %668 = vmatmul.mubr.f32.gmra.mxu0 %v46
  %v669 = vpop.f32.mrf.mxu0
  %v670 = vadd.f32 0.0, %v669
  %v671 = vpop.f32.mrf.mxu0
  %672 = vmatprep.mubr.f32.mxu0 %v49
  %673 = vmatmul.mubr.f32.gmra.mxu0 %v48
  %v674 = vpop.f32.mrf.mxu0
  %v675 = vadd.f32 0.0, %v674
  %v676 = vpop.f32.mrf.mxu0
  %677 = vdwg.mxu0
  %v678 = vmax.f32 %v590, 0.0
  %v679 = vmax.f32 %v595, 0.0
  %v680 = vmax.f32 %v600, 0.0
  %v681 = vmax.f32 %v605, 0.0
  %v682 = vmax.f32 %v610, 0.0
  %v683 = vmax.f32 %v615, 0.0
  %v684 = vmax.f32 %v620, 0.0
  %v685 = vmax.f32 %v625, 0.0
  %v686 = vmax.f32 %v630, 0.0
  %v687 = vmax.f32 %v635, 0.0
  %v688 = vmax.f32 %v640, 0.0
  %v689 = vmax.f32 %v645, 0.0
  %v690 = vmax.f32 %v650, 0.0
  %v691 = vmax.f32 %v655, 0.0
  %v692 = vmax.f32 %v660, 0.0
  %v693 = vmax.f32 %v665, 0.0
  %v694 = vmax.f32 %v670, 0.0
  %v695 = vmax.f32 %v675, 0.0
  %696 = vmatprep.subr.mxu0 0.0
  %697 = vmatpush1.msra.mxu0 %v693
  %698 = vmatprep.subr.mxu0 0.0
  %699 = vmatpush1.msra.mxu0 %v692
  %700 = vmatprep.subr.mxu0 0.0
  %701 = vmatpush1.msra.mxu0 %v691
  %702 = vmatprep.subr.mxu0 0.0
  %703 = vmatpush1.msra.mxu0 %v690
  %704 = vmatprep.subr.mxu0 0.0
  %705 = vmatpush1.msra.mxu0 %v689
  %706 = vmatprep.subr.mxu0 0.0
  %707 = vmatpush1.msra.mxu0 %v688
  %708 = vmatprep.subr.mxu0 0.0
  %709 = vmatpush1.msra.mxu0 %v687
  %710 = vmatprep.subr.mxu0 0.0
  %711 = vmatpush1.msra.mxu0 %v686
  %712 = vmatprep.subr.mxu0 0.0
  %713 = vmatpush1.msra.mxu0 %v685
  %714 = vmatprep.subr.mxu0 0.0
  %715 = vmatpush1.msra.mxu0 %v684
  %716 = vmatprep.subr.mxu0 0.0
  %717 = vmatpush1.msra.mxu0 %v683
  %718 = vmatprep.subr.mxu0 0.0
  %719 = vmatpush1.msra.mxu0 %v682
  %720 = vmatprep.subr.mxu0 0.0
  %721 = vmatpush1.msra.mxu0 %v681
  %722 = vmatprep.subr.mxu0 0.0
  %723 = vmatpush1.msra.mxu0 %v680
  %724 = vmatprep.subr.mxu0 0.0
  %725 = vmatpush1.msra.mxu0 %v679
  %726 = vmatprep.subr.mxu0 0.0
  %727 = vmatpush1.msra.mxu0 %v678
  %728 = vmatprep.subr.mxu0 0.0
  %729 = vmatpush2.msra.mxu0 0.0
  %730 = vmatprep.subr.mxu0 0.0
  %731 = vmatpush2.msra.mxu0 0.0
  %732 = vmatprep.subr.mxu0 0.0
  %733 = vmatpush2.msra.mxu0 0.0
  %734 = vmatprep.subr.mxu0 0.0
  %735 = vmatpush2.msra.mxu0 0.0
  %736 = vmatprep.subr.mxu0 0.0
  %737 = vmatpush2.msra.mxu0 0.0
  %738 = vmatprep.subr.mxu0 0.0
  %739 = vmatpush2.msra.mxu0 0.0
  %740 = vmatprep.subr.mxu0 0.0
  %741 = vmatpush2.msra.mxu0 0.0
  %742 = vmatprep.subr.mxu0 0.0
  %743 = vmatpush2.msra.mxu0 0.0
  %744 = vmatprep.subr.mxu0 0.0
  %745 = vmatpush2.msra.mxu0 0.0
  %746 = vmatprep.subr.mxu0 0.0
  %747 = vmatpush2.msra.mxu0 0.0
  %748 = vmatprep.subr.mxu0 0.0
  %749 = vmatpush2.msra.mxu0 0.0
  %750 = vmatprep.subr.mxu0 0.0
  %751 = vmatpush2.msra.mxu0 0.0
  %752 = vmatprep.subr.mxu0 0.0
  %753 = vmatpush2.msra.mxu0 0.0
  %754 = vmatprep.subr.mxu0 0.0
  %755 = vmatpush2.msra.mxu0 0.0
  %756 = vmatprep.subr.mxu0 0.0
  %757 = vmatpush2.msra.mxu0 %v695
  %758 = vmatprep.subr.mxu0 0.0
  %759 = vmatpush2.msra.mxu0 %v694
  %760 = vmatprep.mubr.f32.mxu0 %v132
  %761 = vmatmul.mubr.f32.gmra.mxu0 %v109
  %v762 = vpop.f32.mrf.mxu0
  %v763 = vadd.f32 0.0, %v762
  %v764 = vpop.f32.mrf.mxu0
  %765 = vmatprep.mubr.f32.mxu0 %v135
  %766 = vmatmul.mubr.f32.gmra.mxu0 %v111
  %v767 = vpop.f32.mrf.mxu0
  %v768 = vadd.f32 0.0, %v767
  %v769 = vpop.f32.mrf.mxu0
  %770 = vmatprep.mubr.f32.mxu0 %v138
  %771 = vmatmul.mubr.f32.gmra.mxu0 %v113
  %v772 = vpop.f32.mrf.mxu0
  %v773 = vadd.f32 0.0, %v772
  %v774 = vpop.f32.mrf.mxu0
  %775 = vdwg.mxu0
  %776 = vst.msk [vmem:[#allocation2] sm:$0xff] %vm115, %v678
  %777 = vst.msk [vmem:[#allocation2 + $0x8] sm:$0xff] %vm115, %v679
  %778 = vst.msk [vmem:[#allocation2 + $0x10] sm:$0xff] %vm115, %v680
  %779 = vst.msk [vmem:[#allocation2 + $0x18] sm:$0xff] %vm115, %v681
  %780 = vst.msk [vmem:[#allocation2 + $0x20] sm:$0xff] %vm115, %v682
  %781 = vst.msk [vmem:[#allocation2 + $0x28] sm:$0xff] %vm115, %v683
  %782 = vst.msk [vmem:[#allocation2 + $0x30] sm:$0xff] %vm115, %v684
  %783 = vst.msk [vmem:[#allocation2 + $0x38] sm:$0xff] %vm115, %v685
  %784 = vst.msk [vmem:[#allocation2 + $0x40] sm:$0xff] %vm115, %v686
  %785 = vst.msk [vmem:[#allocation2 + $0x48] sm:$0xff] %vm115, %v687
  %786 = vst.msk [vmem:[#allocation2 + $0x50] sm:$0xff] %vm115, %v688
  %787 = vst.msk [vmem:[#allocation2 + $0x58] sm:$0xff] %vm115, %v689
  %788 = vst.msk [vmem:[#allocation2 + $0x60] sm:$0xff] %vm115, %v690
  %789 = vst.msk [vmem:[#allocation2 + $0x68] sm:$0xff] %vm115, %v691
  %790 = vst.msk [vmem:[#allocation2 + $0x70] sm:$0xff] %vm115, %v692
  %791 = vst.msk [vmem:[#allocation2 + $0x78] sm:$0xff] %vm115, %v693
  %792 = vst.msk [vmem:[#allocation2 + $0x80] sm:$0xff] %vm115, %v694
  %793 = vst.msk [vmem:[#allocation2 + $0x88] sm:$0xff] %vm115, %v695
  %v794 = vld [vmem:[#allocation2] sm:$0xff]
  %v795 = vld [vmem:[#allocation2 + $0x8] sm:$0xff]
  %v796 = vld [vmem:[#allocation2 + $0x10] sm:$0xff]
  %v797 = vld [vmem:[#allocation2 + $0x18] sm:$0xff]
  %v798 = vld [vmem:[#allocation2 + $0x20] sm:$0xff]
  %v799 = vld [vmem:[#allocation2 + $0x28] sm:$0xff]
  %v800 = vld [vmem:[#allocation2 + $0x30] sm:$0xff]
  %v801 = vld [vmem:[#allocation2 + $0x38] sm:$0xff]
  %v802 = vld [vmem:[#allocation2 + $0x40] sm:$0xff]
  %v803 = vld [vmem:[#allocation2 + $0x48] sm:$0xff]
  %v804 = vld [vmem:[#allocation2 + $0x50] sm:$0xff]
  %v805 = vld [vmem:[#allocation2 + $0x58] sm:$0xff]
  %v806 = vld [vmem:[#allocation2 + $0x60] sm:$0xff]
  %v807 = vld [vmem:[#allocation2 + $0x68] sm:$0xff]
  %v808 = vld [vmem:[#allocation2 + $0x70] sm:$0xff]
  %v809 = vld [vmem:[#allocation2 + $0x78] sm:$0xff]
  %v810 = vld [vmem:[#allocation2 + $0x80] sm:$0xff]
  %v811 = vld [vmem:[#allocation2 + $0x88] sm:$0xff]
  %v812 = vld [vmem:[#allocation2 + $0x90] sm:$0xff]
  %v813 = vld [vmem:[#allocation2 + $0x98] sm:$0xff]
  %v814 = vld [vmem:[#allocation2 + $0xa0] sm:$0xff]
  %v815 = vld [vmem:[#allocation2 + $0xa8] sm:$0xff]
  %v816 = vld [vmem:[#allocation2 + $0xb0] sm:$0xff]
  %v817 = vld [vmem:[#allocation2 + $0xb8] sm:$0xff]
  %v818 = vld [vmem:[#allocation2 + $0xc0] sm:$0xff]
  %v819 = vld [vmem:[#allocation2 + $0xc8] sm:$0xff]
  %v820 = vld [vmem:[#allocation2 + $0xd0] sm:$0xff]
  %v821 = vld [vmem:[#allocation2 + $0xd8] sm:$0xff]
  %v822 = vld [vmem:[#allocation2 + $0xe0] sm:$0xff]
  %v823 = vld [vmem:[#allocation2 + $0xe8] sm:$0xff]
  %v824 = vld [vmem:[#allocation2 + $0xf0] sm:$0xff]
  %v825 = vld [vmem:[#allocation2 + $0xf8] sm:$0xff]
  %826 = vmatprep.subr.mxu0 0.0
  %827 = vmatpush1.msra.mxu0 %v809
  %828 = vmatprep.subr.mxu0 0.0
  %829 = vmatpush1.msra.mxu0 %v808
  %830 = vmatprep.subr.mxu0 0.0
  %831 = vmatpush1.msra.mxu0 %v807
  %832 = vmatprep.subr.mxu0 0.0
  %833 = vmatpush1.msra.mxu0 %v806
  %834 = vmatprep.subr.mxu0 0.0
  %835 = vmatpush1.msra.mxu0 %v805
  %836 = vmatprep.subr.mxu0 0.0
  %837 = vmatpush1.msra.mxu0 %v804
  %838 = vmatprep.subr.mxu0 0.0
  %839 = vmatpush1.msra.mxu0 %v803
  %840 = vmatprep.subr.mxu0 0.0
  %841 = vmatpush1.msra.mxu0 %v802
  %842 = vmatprep.subr.mxu0 0.0
  %843 = vmatpush1.msra.mxu0 %v801
  %844 = vmatprep.subr.mxu0 0.0
  %845 = vmatpush1.msra.mxu0 %v800
  %846 = vmatprep.subr.mxu0 0.0
  %847 = vmatpush1.msra.mxu0 %v799
  %848 = vmatprep.subr.mxu0 0.0
  %849 = vmatpush1.msra.mxu0 %v798
  %850 = vmatprep.subr.mxu0 0.0
  %851 = vmatpush1.msra.mxu0 %v797
  %852 = vmatprep.subr.mxu0 0.0
  %853 = vmatpush1.msra.mxu0 %v796
  %854 = vmatprep.subr.mxu0 0.0
  %855 = vmatpush1.msra.mxu0 %v795
  %856 = vmatprep.subr.mxu0 0.0
  %857 = vmatpush1.msra.mxu0 %v794
  %858 = vmatprep.subr.mxu0 0.0
  %859 = vmatpush2.msra.mxu0 %v825
  %860 = vmatprep.subr.mxu0 0.0
  %861 = vmatpush2.msra.mxu0 %v824
  %862 = vmatprep.subr.mxu0 0.0
  %863 = vmatpush2.msra.mxu0 %v823
  %864 = vmatprep.subr.mxu0 0.0
  %865 = vmatpush2.msra.mxu0 %v822
  %866 = vmatprep.subr.mxu0 0.0
  %867 = vmatpush2.msra.mxu0 %v821
  %868 = vmatprep.subr.mxu0 0.0
  %869 = vmatpush2.msra.mxu0 %v820
  %870 = vmatprep.subr.mxu0 0.0
  %871 = vmatpush2.msra.mxu0 %v819
  %872 = vmatprep.subr.mxu0 0.0
  %873 = vmatpush2.msra.mxu0 %v818
  %874 = vmatprep.subr.mxu0 0.0
  %875 = vmatpush2.msra.mxu0 %v817
  %876 = vmatprep.subr.mxu0 0.0
  %877 = vmatpush2.msra.mxu0 %v816
  %878 = vmatprep.subr.mxu0 0.0
  %879 = vmatpush2.msra.mxu0 %v815
  %880 = vmatprep.subr.mxu0 0.0
  %881 = vmatpush2.msra.mxu0 %v814
  %882 = vmatprep.subr.mxu0 0.0
  %883 = vmatpush2.msra.mxu0 %v813
  %884 = vmatprep.subr.mxu0 0.0
  %885 = vmatpush2.msra.mxu0 %v812
  %886 = vmatprep.subr.mxu0 0.0
  %887 = vmatpush2.msra.mxu0 %v811
  %888 = vmatprep.subr.mxu0 0.0
  %889 = vmatpush2.msra.mxu0 %v810
  %890 = vmatprep.mubr.f32.mxu0 %v15
  %891 = vmatmul.mubr.f32.gmra.mxu0 %v14
  %v892 = vpop.f32.mrf.mxu0
  %v893 = vadd.f32 0.0, %v892
  %v894 = vpop.f32.mrf.mxu0
  %895 = vmatprep.mubr.f32.mxu0 %v17
  %896 = vmatmul.mubr.f32.gmra.mxu0 %v16
  %v897 = vpop.f32.mrf.mxu0
  %v898 = vadd.f32 0.0, %v897
  %v899 = vpop.f32.mrf.mxu0
  %900 = vmatprep.mubr.f32.mxu0 %v19
  %901 = vmatmul.mubr.f32.gmra.mxu0 %v18
  %v902 = vpop.f32.mrf.mxu0
  %v903 = vadd.f32 0.0, %v902
  %v904 = vpop.f32.mrf.mxu0
  %905 = vmatprep.mubr.f32.mxu0 %v21
  %906 = vmatmul.mubr.f32.gmra.mxu0 %v20
  %v907 = vpop.f32.mrf.mxu0
  %v908 = vadd.f32 0.0, %v907
  %v909 = vpop.f32.mrf.mxu0
  %910 = vmatprep.mubr.f32.mxu0 %v23
  %911 = vmatmul.mubr.f32.gmra.mxu0 %v22
  %v912 = vpop.f32.mrf.mxu0
  %v913 = vadd.f32 0.0, %v912
  %v914 = vpop.f32.mrf.mxu0
  %915 = vmatprep.mubr.f32.mxu0 %v25
  %916 = vmatmul.mubr.f32.gmra.mxu0 %v24
  %v917 = vpop.f32.mrf.mxu0
  %v918 = vadd.f32 0.0, %v917
  %v919 = vpop.f32.mrf.mxu0
  %920 = vmatprep.mubr.f32.mxu0 %v27
  %921 = vmatmul.mubr.f32.gmra.mxu0 %v26
  %v922 = vpop.f32.mrf.mxu0
  %v923 = vadd.f32 0.0, %v922
  %v924 = vpop.f32.mrf.mxu0
  %925 = vmatprep.mubr.f32.mxu0 %v29
  %926 = vmatmul.mubr.f32.gmra.mxu0 %v28
  %v927 = vpop.f32.mrf.mxu0
  %v928 = vadd.f32 0.0, %v927
  %v929 = vpop.f32.mrf.mxu0
  %930 = vmatprep.mubr.f32.mxu0 %v31
  %931 = vmatmul.mubr.f32.gmra.mxu0 %v30
  %v932 = vpop.f32.mrf.mxu0
  %v933 = vadd.f32 0.0, %v932
  %v934 = vpop.f32.mrf.mxu0
  %935 = vmatprep.mubr.f32.mxu0 %v33
  %936 = vmatmul.mubr.f32.gmra.mxu0 %v32
  %v937 = vpop.f32.mrf.mxu0
  %v938 = vadd.f32 0.0, %v937
  %v939 = vpop.f32.mrf.mxu0
  %940 = vmatprep.mubr.f32.mxu0 %v35
  %941 = vmatmul.mubr.f32.gmra.mxu0 %v34
  %v942 = vpop.f32.mrf.mxu0
  %v943 = vadd.f32 0.0, %v942
  %v944 = vpop.f32.mrf.mxu0
  %945 = vmatprep.mubr.f32.mxu0 %v37
  %946 = vmatmul.mubr.f32.gmra.mxu0 %v36
  %v947 = vpop.f32.mrf.mxu0
  %v948 = vadd.f32 0.0, %v947
  %v949 = vpop.f32.mrf.mxu0
  %950 = vmatprep.mubr.f32.mxu0 %v39
  %951 = vmatmul.mubr.f32.gmra.mxu0 %v38
  %v952 = vpop.f32.mrf.mxu0
  %v953 = vadd.f32 0.0, %v952
  %v954 = vpop.f32.mrf.mxu0
  %955 = vmatprep.mubr.f32.mxu0 %v41
  %956 = vmatmul.mubr.f32.gmra.mxu0 %v40
  %v957 = vpop.f32.mrf.mxu0
  %v958 = vadd.f32 0.0, %v957
  %v959 = vpop.f32.mrf.mxu0
  %960 = vmatprep.mubr.f32.mxu0 %v43
  %961 = vmatmul.mubr.f32.gmra.mxu0 %v42
  %v962 = vpop.f32.mrf.mxu0
  %v963 = vadd.f32 0.0, %v962
  %v964 = vpop.f32.mrf.mxu0
  %965 = vmatprep.mubr.f32.mxu0 %v45
  %966 = vmatmul.mubr.f32.gmra.mxu0 %v44
  %v967 = vpop.f32.mrf.mxu0
  %v968 = vadd.f32 0.0, %v967
  %v969 = vpop.f32.mrf.mxu0
  %970 = vmatprep.mubr.f32.mxu0 %v47
  %971 = vmatmul.mubr.f32.gmra.mxu0 %v46
  %v972 = vpop.f32.mrf.mxu0
  %v973 = vadd.f32 0.0, %v972
  %v974 = vpop.f32.mrf.mxu0
  %975 = vmatprep.mubr.f32.mxu0 %v49
  %976 = vmatmul.mubr.f32.gmra.mxu0 %v48
  %v977 = vpop.f32.mrf.mxu0
  %v978 = vadd.f32 0.0, %v977
  %v979 = vpop.f32.mrf.mxu0
  %980 = vdwg.mxu0
  %v981 = vmax.f32 %v893, 0.0
  %v982 = vmax.f32 %v898, 0.0
  %v983 = vmax.f32 %v903, 0.0
  %v984 = vmax.f32 %v908, 0.0
  %v985 = vmax.f32 %v913, 0.0
  %v986 = vmax.f32 %v918, 0.0
  %v987 = vmax.f32 %v923, 0.0
  %v988 = vmax.f32 %v928, 0.0
  %v989 = vmax.f32 %v933, 0.0
  %v990 = vmax.f32 %v938, 0.0
  %v991 = vmax.f32 %v943, 0.0
  %v992 = vmax.f32 %v948, 0.0
  %v993 = vmax.f32 %v953, 0.0
  %v994 = vmax.f32 %v958, 0.0
  %v995 = vmax.f32 %v963, 0.0
  %v996 = vmax.f32 %v968, 0.0
  %v997 = vmax.f32 %v973, 0.0
  %v998 = vmax.f32 %v978, 0.0
  %999 = vmatprep.subr.mxu0 0.0
  %1000 = vmatpush1.msra.mxu0 %v996
  %1001 = vmatprep.subr.mxu0 0.0
  %1002 = vmatpush1.msra.mxu0 %v995
  %1003 = vmatprep.subr.mxu0 0.0
  %1004 = vmatpush1.msra.mxu0 %v994
  %1005 = vmatprep.subr.mxu0 0.0
  %1006 = vmatpush1.msra.mxu0 %v993
  %1007 = vmatprep.subr.mxu0 0.0
  %1008 = vmatpush1.msra.mxu0 %v992
  %1009 = vmatprep.subr.mxu0 0.0
  %1010 = vmatpush1.msra.mxu0 %v991
  %1011 = vmatprep.subr.mxu0 0.0
  %1012 = vmatpush1.msra.mxu0 %v990
  %1013 = vmatprep.subr.mxu0 0.0
  %1014 = vmatpush1.msra.mxu0 %v989
  %1015 = vmatprep.subr.mxu0 0.0
  %1016 = vmatpush1.msra.mxu0 %v988
  %1017 = vmatprep.subr.mxu0 0.0
  %1018 = vmatpush1.msra.mxu0 %v987
  %1019 = vmatprep.subr.mxu0 0.0
  %1020 = vmatpush1.msra.mxu0 %v986
  %1021 = vmatprep.subr.mxu0 0.0
  %1022 = vmatpush1.msra.mxu0 %v985
  %1023 = vmatprep.subr.mxu0 0.0
  %1024 = vmatpush1.msra.mxu0 %v984
  %1025 = vmatprep.subr.mxu0 0.0
  %1026 = vmatpush1.msra.mxu0 %v983
  %1027 = vmatprep.subr.mxu0 0.0
  %1028 = vmatpush1.msra.mxu0 %v982
  %1029 = vmatprep.subr.mxu0 0.0
  %1030 = vmatpush1.msra.mxu0 %v981
  %1031 = vmatprep.subr.mxu0 0.0
  %1032 = vmatpush2.msra.mxu0 0.0
  %1033 = vmatprep.subr.mxu0 0.0
  %1034 = vmatpush2.msra.mxu0 0.0
  %1035 = vmatprep.subr.mxu0 0.0
  %1036 = vmatpush2.msra.mxu0 0.0
  %1037 = vmatprep.subr.mxu0 0.0
  %1038 = vmatpush2.msra.mxu0 0.0
  %1039 = vmatprep.subr.mxu0 0.0
  %1040 = vmatpush2.msra.mxu0 0.0
  %1041 = vmatprep.subr.mxu0 0.0
  %1042 = vmatpush2.msra.mxu0 0.0
  %1043 = vmatprep.subr.mxu0 0.0
  %1044 = vmatpush2.msra.mxu0 0.0
  %1045 = vmatprep.subr.mxu0 0.0
  %1046 = vmatpush2.msra.mxu0 0.0
  %1047 = vmatprep.subr.mxu0 0.0
  %1048 = vmatpush2.msra.mxu0 0.0
  %1049 = vmatprep.subr.mxu0 0.0
  %1050 = vmatpush2.msra.mxu0 0.0
  %1051 = vmatprep.subr.mxu0 0.0
  %1052 = vmatpush2.msra.mxu0 0.0
  %1053 = vmatprep.subr.mxu0 0.0
  %1054 = vmatpush2.msra.mxu0 0.0
  %1055 = vmatprep.subr.mxu0 0.0
  %1056 = vmatpush2.msra.mxu0 0.0
  %1057 = vmatprep.subr.mxu0 0.0
  %1058 = vmatpush2.msra.mxu0 0.0
  %1059 = vmatprep.subr.mxu0 0.0
  %1060 = vmatpush2.msra.mxu0 %v998
  %1061 = vmatprep.subr.mxu0 0.0
  %1062 = vmatpush2.msra.mxu0 %v997
  %1063 = vmatprep.mubr.f32.mxu0 %v132
  %1064 = vmatmul.mubr.f32.gmra.mxu0 %v109
  %v1065 = vpop.f32.mrf.mxu0
  %v1066 = vadd.f32 0.0, %v1065
  %v1067 = vpop.f32.mrf.mxu0
  %1068 = vmatprep.mubr.f32.mxu0 %v135
  %1069 = vmatmul.mubr.f32.gmra.mxu0 %v111
  %v1070 = vpop.f32.mrf.mxu0
  %v1071 = vadd.f32 0.0, %v1070
  %v1072 = vpop.f32.mrf.mxu0
  %1073 = vmatprep.mubr.f32.mxu0 %v138
  %1074 = vmatmul.mubr.f32.gmra.mxu0 %v113
  %v1075 = vpop.f32.mrf.mxu0
  %v1076 = vadd.f32 0.0, %v1075
  %v1077 = vpop.f32.mrf.mxu0
  %1078 = vdwg.mxu0
  %v1079 = vmax.f32 %v207, 0.0
  %v1080 = vmax.f32 %v212, 0.0
  %v1081 = vmax.f32 %v217, 0.0
  %1085 = vrot.lane.b32.xlu0 %v460, 32
  %v1086 = vpop.permute.xlu0 %1085
  %1087 = vrot.lane.b32.xlu0 %v465, 32
  %v1088 = vpop.permute.xlu0 %1087
  %1089 = vrot.lane.b32.xlu0 %v470, 32
  %v1090 = vpop.permute.xlu0 %1089
  %1097 = vrot.lane.b32.xlu0 %v763, 64
  %v1098 = vpop.permute.xlu0 %1097
  %1099 = vrot.lane.b32.xlu0 %v768, 64
  %v1100 = vpop.permute.xlu0 %1099
  %1101 = vrot.lane.b32.xlu0 %v773, 64
  %v1102 = vpop.permute.xlu0 %1101
  %1109 = vrot.lane.b32.xlu0 %v1066, 96
  %v1110 = vpop.permute.xlu0 %1109
  %1111 = vrot.lane.b32.xlu0 %v1071, 96
  %v1112 = vpop.permute.xlu0 %1111
  %1113 = vrot.lane.b32.xlu0 %v1076, 96
  %v1114 = vpop.permute.xlu0 %1113
  %v1118 = vsel %vm115, %v1079, %v1086
  %v1119 = vsel %vm115, %v1080, %v1088
  %v1120 = vsel %vm115, %v1081, %v1090
  %vm1121 = vcmask 523264
  %v1122 = vsel %vm1121, %v1118, %v1098
  %v1123 = vsel %vm1121, %v1119, %v1100
  %v1124 = vsel %vm1121, %v1120, %v1102
  %vm1125 = vcmask 785408
  %v1126 = vsel %vm1125, %v1122, %v1110
  %v1127 = vsel %vm1125, %v1123, %v1112
  %v1128 = vsel %vm1125, %v1124, %v1114
  %1129 = vst [vmem:[%s3] sm:$0xff] %v1126
  %1130 = vst [vmem:[%s3 + $0x8] sm:$0xff] %v1127
  %1131 = vst [vmem:[%s3 + $0x10] sm:$0xff] %v1128
  // Predicated region
  $region14: #{bpr_forward.1} parent=0 // pred_check
    _
  $region15: #{bpr_forward.1} parent=0 // pred_check_branch
    %1133 = sbr.rel (0) target = $region17
  $region16: #{bpr_forward.1} parent=0 // pred_region
    _
  $region17: #{bpr_forward.1} parent=0 // pred_fallthru
    _
  // Predicated region
  $region18: #{bpr_forward.1} parent=0 // pred_check
    _
  $region19: #{bpr_forward.1} parent=0 // pred_check_branch
    %1135 = sbr.rel (0) target = $region21
  $region20: #{bpr_forward.1} parent=0 // pred_region
    _
  $region21: #{bpr_forward.1} parent=0 // pred_fallthru
    _

</llo_original>
